<compile_context>
chip_gen: v7x
topology: tpu7x:2x2x1
jax: 0.10.0
libtpu: 0.0.40
codegen_flags: <defaults>
</compile_context>

<pallas_src>
import functools
import math

import jax
import jax.numpy as jnp
from jax.experimental import pallas as pl
from jax.experimental.pallas import tpu as pltpu


# ---------------------------------------------------------------------------
# Static sinusoidal table (matches the PyTorch __init__ exactly).
# Registered-buffer shape in PyTorch: [max_len, 1, d_model].
# ---------------------------------------------------------------------------
def build_pe_table(max_len, d_model, dtype=jnp.float32):
    position = jnp.arange(max_len, dtype=jnp.float32)[:, None]               # (L, 1)
    div_term = jnp.exp(
        jnp.arange(0, d_model, 2, dtype=jnp.float32) * (-math.log(10000.0) / d_model)
    )                                                                        # (D/2,)
    pe = jnp.zeros((max_len, d_model), dtype=jnp.float32)
    pe = pe.at[:, 0::2].set(jnp.sin(position * div_term))
    pe = pe.at[:, 1::2].set(jnp.cos(position * div_term))
    return pe.astype(dtype)[:, None, :]


# ---------------------------------------------------------------------------
# Kernels
# ---------------------------------------------------------------------------
def _add_pe_kernel(x_ref, pe_ref, o_ref):
    # x_ref: (TS, B, D)   pe_ref: (TS, 1, D)   o_ref: (TS, B, D)
    # (TS,1,D) broadcasts over batch on the sublane axis; D stays lane-dense.
    o_ref[...] = (x_ref[...] + pe_ref[...]).astype(o_ref.dtype)


def _hash_u32(idx, seed):
    """Counter-based stateless PRNG: murmur3 finalizer on (idx ^ seed)."""
    h = idx ^ seed
    h = h ^ (h >> 16)
    h = h * jnp.uint32(0x85EBCA6B)
    h = h ^ (h >> 13)
    h = h * jnp.uint32(0xC2B2AE35)
    h = h ^ (h >> 16)
    return h


def _add_pe_dropout_kernel(seed_ref, x_ref, pe_ref, o_ref, *, p_drop, ts):
    # seed_ref: SMEM (1,) int32 scalar-prefetch arg.
    y = x_ref[...] + pe_ref[...]
    tile_rows, batch, d_model = x_ref.shape           # static Python ints
    shape = (tile_rows, batch, d_model)

    # Globally-unique element index -> dropout mask is independent of tiling
    # and of grid-step execution order (safe under megacore "parallel").
    row0 = (pl.program_id(0) * ts).astype(jnp.uint32)
    i0 = jax.lax.broadcasted_iota(jnp.uint32, shape, 0) + row0
    i1 = jax.lax.broadcasted_iota(jnp.uint32, shape, 1)
    i2 = jax.lax.broadcasted_iota(jnp.uint32, shape, 2)
    idx = (i0 * jnp.uint32(batch) + i1) * jnp.uint32(d_model) + i2

    bits = _hash_u32(idx, seed_ref[0].astype(jnp.uint32))
    threshold = jnp.uint32(min(int(p_drop * 4294967296.0), 4294967295))
    keep = bits >= threshold                           # P(keep) = 1 - p_drop
    scale = 1.0 / (1.0 - p_drop)                       # inverted dropout
    o_ref[...] = jnp.where(keep, y * scale, jnp.zeros_like(y)).astype(o_ref.dtype)


# ---------------------------------------------------------------------------
# Tile sizing: pick the largest seq tile that keeps the double-buffered
# pipeline footprint (2*x + 2*out + 2*pe) under a conservative VMEM budget
# that fits every generation (v7x: 64 MiB physical / 32 MiB scoped default).
# ---------------------------------------------------------------------------
def _choose_seq_tile(seq, batch, d_model, itemsize, budget_bytes=32 << 20):
    per_row = 2 * (2 * batch * d_model + d_model) * itemsize
    ts = max(1, budget_bytes // max(per_row, 1))
    ts = min(ts, seq)
    if ts < seq:
        # keep >= ~4 grid steps so prefetch/writeback actually overlaps
        ts = min(ts, max(1, -(-seq // 4)))
    return int(ts)


# ---------------------------------------------------------------------------
# Wrapper
# ---------------------------------------------------------------------------
def positional_encoding_forward(x, pe_table, *, p_drop=0.1, training=False, seed=0):
    """x: [seq, batch, d_model];  pe_table: [max_len, 1, d_model]."""
    seq, batch, d_model = x.shape
    max_len, one, d2 = pe_table.shape
    assert one == 1 and d2 == d_model and seq <= max_len
    assert 0.0 <= p_drop < 1.0, "p_drop must be in [0, 1)"

    # Match pe dtype to x: halves pe DMA traffic for bf16 and keeps the add in
    # packed vregs; avoids a mixed-dtype store.
    if pe_table.dtype != x.dtype:
        pe_table = pe_table.astype(x.dtype)

    ts = _choose_seq_tile(seq, batch, d_model, jnp.dtype(x.dtype).itemsize)
    grid = (pl.cdiv(seq, ts),)
    out_shape = jax.ShapeDtypeStruct(x.shape, x.dtype)

    x_block = (ts, batch, d_model)
    pe_block = (ts, 1, d_model)
    cparams = pltpu.CompilerParams(
        dimension_semantics=("parallel",),        # megacore-shardable on v7x
        vmem_limit_bytes=48 * 1024 * 1024,        # headroom over the 32 MiB budget
    )

    if (not training) or p_drop == 0.0:
        # Eval mode: dropout is the identity -> pure elementwise add.
        return pl.pallas_call(
            _add_pe_kernel,
            out_shape=out_shape,
            grid_spec=pltpu.PrefetchScalarGridSpec(
                num_scalar_prefetch=0,
                grid=grid,
                in_specs=[
                    pl.BlockSpec(x_block, lambda i: (i, 0, 0)),
                    pl.BlockSpec(pe_block, lambda i: (i, 0, 0)),  # only rows < seq DMA'd
                ],
                out_specs=pl.BlockSpec(x_block, lambda i: (i, 0, 0)),
            ),
            compiler_params=cparams,
        )(x, pe_table)

    # Training mode: add + inverted dropout with a counter-based hash PRNG.
    seeds = jnp.asarray([int(seed) & 0x7FFFFFFF], dtype=jnp.int32)
    kernel = functools.partial(_add_pe_dropout_kernel, p_drop=float(p_drop), ts=ts)
    return pl.pallas_call(
        kernel,
        out_shape=out_shape,
        grid_spec=pltpu.PrefetchScalarGridSpec(
            num_scalar_prefetch=1,
            grid=grid,
            in_specs=[
                pl.BlockSpec(x_block, lambda i, s: (i, 0, 0)),
                pl.BlockSpec(pe_block, lambda i, s: (i, 0, 0)),
            ],
            out_specs=pl.BlockSpec(x_block, lambda i, s: (i, 0, 0)),
        ),
        compiler_params=cparams,
    )(seeds, x, pe_table)


# ---------------------------------------------------------------------------
# Self-test
# ---------------------------------------------------------------------------
if __name__ == "__main__":
    seq, batch, d_model = 8, 4, 32
    max_len = 64
    p_drop = 0.1

    key = jax.random.PRNGKey(0)
    x = jax.random.normal(key, (seq, batch, d_model), dtype=jnp.float32)
    pe_table = build_pe_table(max_len, d_model)

    # --- eval mode (dropout = identity): exact check vs. plain JAX reference
    out = positional_encoding_forward(x, pe_table, p_drop=p_drop, training=False)
    out = jax.block_until_ready(out)
    ref = x + pe_table[:seq]                      # broadcast (seq,1,D) over batch
    assert out.shape == x.shape
    assert jnp.allclose(out, ref, atol=1e-6, rtol=1e-6), "eval-mode mismatch"

    # --- training mode: surviving elements must equal (x+pe)/(1-p); drop rate sane
    out_tr = positional_encoding_forward(
        x, pe_table, p_drop=p_drop, training=True, seed=1234
    )
    out_tr = jax.block_until_ready(out_tr)
    assert out_tr.shape == x.shape
    kept = out_tr != 0.0
    scaled_ref = ref / (1.0 - p_drop)
    assert jnp.allclose(
        jnp.where(kept, out_tr, 0.0), jnp.where(kept, scaled_ref, 0.0),
        atol=1e-5, rtol=1e-5,
    ), "training-mode kept elements mismatch"
    drop_frac = float(1.0 - jnp.mean(kept.astype(jnp.float32)))
    assert 0.0 <= drop_frac <= 0.35, f"implausible drop fraction {drop_frac}"

    print("KERNEL_OK")
</pallas_src>

<mosaic_0001>
module attributes {stable_mosaic.version = 11 : i64} {
  func.func @_add_pe_kernel(%arg0: i32, %arg1: memref<8x4x32xf32, #tpu.memory_space<vmem>>, %arg2: memref<8x1x32xf32, #tpu.memory_space<vmem>>, %arg3: memref<8x4x32xf32, #tpu.memory_space<vmem>>) attributes {dimension_semantics = [#tpu.dimension_semantics<parallel>], iteration_bounds = array<i64: 1>, scalar_prefetch = 0 : i64, scratch_operands = 0 : i64, tpu.core_type = #tpu.core_type<tc>, window_params = [{transform_indices = @transform_0, window_bounds = array<i64: 8, 4, 32>}, {transform_indices = @transform_1, window_bounds = array<i64: 8, 1, 32>}, {transform_indices = @transform_2, window_bounds = array<i64: 8, 4, 32>}]} {
    %c0 = arith.constant 0 : index
    %c0_0 = arith.constant 0 : index
    %c0_1 = arith.constant 0 : index
    %0 = vector.load %arg1[%c0, %c0_0, %c0_1] : memref<8x4x32xf32, #tpu.memory_space<vmem>>, vector<8x4x32xf32>
    %c0_2 = arith.constant 0 : index
    %c0_3 = arith.constant 0 : index
    %c0_4 = arith.constant 0 : index
    %1 = vector.load %arg2[%c0_2, %c0_3, %c0_4] : memref<8x1x32xf32, #tpu.memory_space<vmem>>, vector<8x1x32xf32>
    %2 = vector.broadcast %1 : vector<8x1x32xf32> to vector<8x4x32xf32>
    %3 = arith.addf %0, %2 : vector<8x4x32xf32>
    %c0_5 = arith.constant 0 : index
    %c0_6 = arith.constant 0 : index
    %c0_7 = arith.constant 0 : index
    %4 = vector.load %arg3[%c0_5, %c0_6, %c0_7] : memref<8x4x32xf32, #tpu.memory_space<vmem>>, vector<8x4x32xf32>
    tpu.vector_store %arg3[%c0_5, %c0_6, %c0_7], %3 {strides = array<i32>} : memref<8x4x32xf32, #tpu.memory_space<vmem>>, vector<8x4x32xf32>,
    return
  }
  func.func @transform_0(%arg0: i32) -> (i32, i32, i32) {
    %c0_i32 = arith.constant 0 : i32
    %c0_i32_0 = arith.constant 0 : i32
    %c0_i32_1 = arith.constant 0 : i32
    return %arg0, %c0_i32, %c0_i32_0 : i32, i32, i32
  }
  func.func @transform_1(%arg0: i32) -> (i32, i32, i32) {
    %c0_i32 = arith.constant 0 : i32
    %c0_i32_0 = arith.constant 0 : i32
    %c0_i32_1 = arith.constant 0 : i32
    return %arg0, %c0_i32, %c0_i32_0 : i32, i32, i32
  }
  func.func @transform_2(%arg0: i32) -> (i32, i32, i32) {
    %c0_i32 = arith.constant 0 : i32
    %c0_i32_0 = arith.constant 0 : i32
    %c0_i32_1 = arith.constant 0 : i32
    return %arg0, %c0_i32, %c0_i32_0 : i32, i32, i32
  }
}

</mosaic_0001>

<llo_original>
// kernel: tpu_custom_call.1
$region0: #{tpu_custom_call.1}
  #allocation0 [shape = 'u32[]', space=smem, size = 0x4, offset = 0x4, fixed_abs, tag = 'smem constant byte address 0x4 - core index']
  #allocation1 [shape = 'u32[144,128]{1,0:T(1,128)}', space=vmem, size = 0x12000, scoped, tag = 'internal scratch']
  %s0 = inlined_call_operand.vmem [shape: f32[8,4,32], index: 0, kind: input, shape index: {}]
  %s1 = inlined_call_operand.vmem [shape: f32[64,1,32], index: 1, kind: input, shape index: {}]
  %s2 = inlined_call_operand.hbm [shape: f32[8,4,32], index: 2, kind: output, shape index: {}]
  %s3 = sld [smem:[#allocation0]]
  $region18: #{tpu_custom_call.1} parent=0
    _
  %s5 = ssub.s32 1, %s3
  %s6 = scalar_select 0, %s5, %s3
  $region1: #{tpu_custom_call.1} parent=0
    #allocation2 [shape = 'u8[16384]{0}', space=vmem, size = 0x4000, scoped, tag = 'output window, operand 0, single buffered']
    #allocation3 [shape = 's32[1]{0}', space=sflag, size = 0x4, scoped, tag = 'scoped memory for tpu_custom_call.1']
    %7 = vsyncpa [#allocation3], 0
    // Predicated region
    $region2: #{tpu_custom_call.1} parent=1 // pred_check
      _
    $region3: #{tpu_custom_call.1} parent=1 // pred_check_branch
      %9 = sbr.rel (0) target = $region5
    $region4: #{tpu_custom_call.1} parent=1 // pred_region
      _
    $region5: #{tpu_custom_call.1} parent=1 // pred_fallthru
      _
    // Predicated region
    $region6: #{tpu_custom_call.1} parent=1 // pred_check
      _
    $region7: #{tpu_custom_call.1} parent=1 // pred_check_branch
      %11 = sbr.rel (0) target = $region9
    $region8: #{tpu_custom_call.1} parent=1 // pred_region
      _
    $region9: #{tpu_custom_call.1} parent=1 // pred_fallthru
      _
    %v12 = vld [vmem:[%s0] sm:$0xf]
    %v13 = vld [vmem:[%s0 + $0x4] sm:$0xf]
    %v14 = vld [vmem:[%s0 + $0x8] sm:$0xf]
    %v15 = vld [vmem:[%s0 + $0xc] sm:$0xf]
    %v16 = vld [vmem:[%s0 + $0x10] sm:$0xf]
    %v17 = vld [vmem:[%s0 + $0x14] sm:$0xf]
    %v18 = vld [vmem:[%s0 + $0x18] sm:$0xf]
    %v19 = vld [vmem:[%s0 + $0x1c] sm:$0xf]
    %v20 = vld [vmem:[%s1] sm:$0x1]
    %v21 = vld [vmem:[%s1 + $0x1] sm:$0x1]
    %v22 = vld [vmem:[%s1 + $0x2] sm:$0x1]
    %v23 = vld [vmem:[%s1 + $0x3] sm:$0x1]
    %v24 = vld [vmem:[%s1 + $0x4] sm:$0x1]
    %v25 = vld [vmem:[%s1 + $0x5] sm:$0x1]
    %v26 = vld [vmem:[%s1 + $0x6] sm:$0x1]
    %v27 = vld [vmem:[%s1 + $0x7] sm:$0x1]
    %v36 = vlaneseq
    %v37 = vshrl.u32 %v36, 7
    %v38 = vsub.s32 0, %v37
    %v39 = vrot.slane %v20, %v38
    %v40 = vlaneseq
    %v41 = vshrl.u32 %v40, 7
    %v42 = vsub.s32 0, %v41
    %v43 = vrot.slane %v21, %v42
    %v44 = vlaneseq
    %v45 = vshrl.u32 %v44, 7
    %v46 = vsub.s32 0, %v45
    %v47 = vrot.slane %v22, %v46
    %v48 = vlaneseq
    %v49 = vshrl.u32 %v48, 7
    %v50 = vsub.s32 0, %v49
    %v51 = vrot.slane %v23, %v50
    %v52 = vlaneseq
    %v53 = vshrl.u32 %v52, 7
    %v54 = vsub.s32 0, %v53
    %v55 = vrot.slane %v24, %v54
    %v56 = vlaneseq
    %v57 = vshrl.u32 %v56, 7
    %v58 = vsub.s32 0, %v57
    %v59 = vrot.slane %v25, %v58
    %v60 = vlaneseq
    %v61 = vshrl.u32 %v60, 7
    %v62 = vsub.s32 0, %v61
    %v63 = vrot.slane %v26, %v62
    %v64 = vlaneseq
    %v65 = vshrl.u32 %v64, 7
    %v66 = vsub.s32 0, %v65
    %v67 = vrot.slane %v27, %v66
    %v76 = vadd.f32 %v12, %v39
    %v77 = vadd.f32 %v13, %v43
    %v78 = vadd.f32 %v14, %v47
    %v79 = vadd.f32 %v15, %v51
    %v80 = vadd.f32 %v16, %v55
    %v81 = vadd.f32 %v17, %v59
    %v82 = vadd.f32 %v18, %v63
    %v83 = vadd.f32 %v19, %v67
    %vm84 = vcmask 257024
    %85 = vst.msk [vmem:[#allocation2] sm:$0xf] %vm84, %v76
    %86 = vst.msk [vmem:[#allocation2 + $0x4] sm:$0xf] %vm84, %v77
    %87 = vst.msk [vmem:[#allocation2 + $0x8] sm:$0xf] %vm84, %v78
    %88 = vst.msk [vmem:[#allocation2 + $0xc] sm:$0xf] %vm84, %v79
    %89 = vst.msk [vmem:[#allocation2 + $0x10] sm:$0xf] %vm84, %v80
    %90 = vst.msk [vmem:[#allocation2 + $0x14] sm:$0xf] %vm84, %v81
    %91 = vst.msk [vmem:[#allocation2 + $0x18] sm:$0xf] %vm84, %v82
    %92 = vst.msk [vmem:[#allocation2 + $0x1c] sm:$0xf] %vm84, %v83
    // Predicated region
    $region10: #{tpu_custom_call.1} parent=1 // pred_check
      _
    $region11: #{tpu_custom_call.1} parent=1 // pred_check_branch
      %94 = sbr.rel (0) target = $region13
    $region12: #{tpu_custom_call.1} parent=1 // pred_region
      %s96 = ssub.s32 512, 512
      %97 = vsyncadd [#allocation3], %s96
      %s98 = sshll.u32 [#allocation2], 4
      %s99 = int_to_ptr.vmem [resolvable:$true] %s98
      %104 = dma.vmem_to_hbm [thread:$0]  %s99, 512, %s2, [#allocation3], 64, 64, 4
    $region13: #{tpu_custom_call.1} parent=1 // pred_fallthru
      _
    // Predicated region
    $region14: #{tpu_custom_call.1} parent=1 // pred_check
      _
    $region15: #{tpu_custom_call.1} parent=1 // pred_check_branch
      %106 = sbr.rel (0) target = $region17
    $region16: #{tpu_custom_call.1} parent=1 // pred_region
      %107 = dma.done [#allocation3], 512
    $region17: #{tpu_custom_call.1} parent=1 // pred_fallthru
      _
    %108 = vsyncpa [#allocation3], 1

</llo_original>
